<compile_context>
chip_gen: v6e
topology: v6e:2x2x1
jax: 0.10.0
libtpu: 0.0.40
codegen_flags: <defaults>
</compile_context>

<pallas_src>
import functools
import math

import jax
import jax.numpy as jnp
from jax.experimental import pallas as pl
from jax.experimental.pallas import tpu as pltpu

_LANE = 128
_SUBLANE = 8


def _round_up(x: int, m: int) -> int:
    return ((x + m - 1) // m) * m


def _pick_tile(dim: int, preferred: int, granule: int = _LANE) -> int:
    """Tile for a lane-aligned axis: multiple of `granule`, <= `preferred`,
    minimizing padded work (ties -> larger tile = fewer grid steps)."""
    dp = _round_up(dim, granule)
    if dp <= preferred:
        return dp  # single block, minimal padding
    best_t, best_pad = granule, _round_up(dim, granule) - dim
    for t in range(2 * granule, preferred + 1, granule):
        pad = _round_up(dim, t) - dim
        if pad < best_pad or (pad == best_pad and t > best_t):
            best_t, best_pad = t, pad
    return best_t


def _pick_tm(m: int, preferred: int = 512) -> int:
    mp8 = _round_up(m, _SUBLANE)
    if mp8 <= preferred:
        return mp8  # single M block, pad only to sublane multiple
    return _pick_tile(m, preferred, granule=_LANE)


def _linear_kernel(x_ref, w_ref, b_ref, o_ref, acc_ref, *, weight_factor, bias_factor):
    # x_ref: (tm, tk), w_ref: (tk, tn), b_ref: (1, tn), o_ref: (tm, tn),
    # acc_ref: (tm, tn) f32 scratch persisting across the K grid axis.
    k = pl.program_id(2)

    @pl.when(k == 0)
    def _():
        acc_ref[...] = jnp.zeros_like(acc_ref)

    # Pure MXU push: operands in native dtype, f32 accumulation.
    acc_ref[...] += jnp.dot(x_ref[...], w_ref[...], preferred_element_type=jnp.float32)

    @pl.when(k == pl.num_programs(2) - 1)
    def _():
        y = acc_ref[...] * weight_factor + bias_factor * b_ref[...].astype(jnp.float32)
        o_ref[...] = y.astype(o_ref.dtype)


def prepare_linear_params(weight, bias, *, tn_pref=1024, tk_pref=512, compute_dtype=None):
    """One-time parameter prep: transpose + pad the weight to (Kp, Np) so the
    per-call path does zero HBM weight rewrites. Call once; reuse per forward."""
    N, K = weight.shape
    tn = _pick_tile(N, tn_pref)
    tk = _pick_tile(K, tk_pref)
    Np = _round_up(N, tn)
    Kp = _round_up(K, tk)

    w_t = weight.T  # (K, N): contraction on dim 0, N lane-dense
    if compute_dtype is not None and w_t.dtype != compute_dtype:
        w_t = w_t.astype(compute_dtype)
    if Kp != K or Np != N:
        w_t = jnp.pad(w_t, ((0, Kp - K), (0, Np - N)))
    b_p = bias if Np == N else jnp.pad(bias, (0, Np - N))
    return {"w": w_t, "b": b_p.reshape(1, Np), "N": N, "K": K, "tn": tn, "tk": tk}


def linear_layer_forward_prepared(x, params, *, weight_factor, bias_factor, tm_pref=512):
    """Pallas LinearLayer forward using prepared (transposed/padded) params."""
    orig_shape = x.shape
    if x.ndim != 2:
        x = x.reshape(-1, orig_shape[-1])
    M, K = x.shape
    assert K == params["K"], "in_features mismatch"

    w_p, b2d = params["w"], params["b"]
    Kp, Np = w_p.shape
    N = params["N"]
    tn, tk = params["tn"], params["tk"]

    tm = _pick_tm(M, tm_pref)
    Mp = _round_up(M, tm)

    # v7x has 2 TensorCores: make sure the parallel grid has >= 2 blocks when
    # the batch fits one M tile, by splitting the N axis.
    if Mp // tm == 1 and Np // tn == 1 and Np >= 2 * _LANE:
        t = (Np // 2) // _LANE * _LANE
        while t >= _LANE:
            if Np % t == 0:
                tn = t
                break
            t -= _LANE

    compute_dtype = w_p.dtype
    out_dtype = x.dtype
    x_c = x if x.dtype == compute_dtype else x.astype(compute_dtype)
    if Mp != M or Kp != K:
        x_c = jnp.pad(x_c, ((0, Mp - M), (0, Kp - K)))  # K-pad contributes exact zeros

    grid = (Mp // tm, Np // tn, Kp // tk)

    kernel = functools.partial(
        _linear_kernel, weight_factor=weight_factor, bias_factor=bias_factor
    )

    cs = jnp.dtype(compute_dtype).itemsize
    os_ = jnp.dtype(out_dtype).itemsize
    cost = pl.CostEstimate(
        flops=2 * Mp * Np * Kp,
        transcendentals=0,
        bytes_accessed=(
            Mp * Kp * cs * (Np // tn)      # x re-read per N block
            + Kp * Np * cs * (Mp // tm)    # w re-read per M block
            + Mp * Np * os_                # output
            + Np * 4
        ),
    )

    out = pl.pallas_call(
        kernel,
        out_shape=jax.ShapeDtypeStruct((Mp, Np), out_dtype),
        grid_spec=pltpu.PrefetchScalarGridSpec(
            num_scalar_prefetch=0,
            grid=grid,
            in_specs=[
                pl.BlockSpec((tm, tk), lambda i, j, k: (i, k)),   # x tile
                pl.BlockSpec((tk, tn), lambda i, j, k: (k, j)),   # weight.T tile
                pl.BlockSpec((1, tn), lambda i, j, k: (0, j)),    # bias row tile
            ],
            out_specs=pl.BlockSpec((tm, tn), lambda i, j, k: (i, j)),
            scratch_shapes=[pltpu.VMEM((tm, tn), jnp.float32)],
        ),
        compiler_params=pltpu.CompilerParams(
            dimension_semantics=("parallel", "parallel", "arbitrary"),
            # Above v5e(16MiB)/v6e(32MiB) scoped defaults, under v7x's 64MiB physical.
            vmem_limit_bytes=48 << 20,
        ),
        cost_estimate=cost,
    )(x_c, w_p, b2d)

    if Mp != M or Np != N:
        out = out[:M, :N]
    if len(orig_shape) != 2:
        out = out.reshape(*orig_shape[:-1], N)
    return out


def linear_layer_forward(
    x, weight, bias, *, weight_factor, bias_factor,
    compute_dtype=None, tm_pref=512, tn_pref=1024, tk_pref=512,
):
    """Convenience one-shot wrapper (for repeated calls, prepare params once)."""
    params = prepare_linear_params(
        weight, bias, tn_pref=tn_pref, tk_pref=tk_pref, compute_dtype=compute_dtype
    )
    return linear_layer_forward_prepared(
        x, params, weight_factor=weight_factor, bias_factor=bias_factor, tm_pref=tm_pref
    )


if __name__ == "__main__":
    # Module hyperparameters (defaults of LinearLayer).
    in_features = 32
    out_features = 64
    weight_init_gain = 1.0
    bias_factor = 0.1
    weight_factor = 1.0

    key = jax.random.PRNGKey(0)
    kx, kw, kb = jax.random.split(key, 3)

    # Parameter init mirroring the module: weight ~ N(0,1)*gain, bias = 0.
    weight = jax.random.normal(kw, (out_features, in_features), jnp.float32)
    weight = weight * weight_init_gain
    bias = jnp.zeros((out_features,), jnp.float32)

    # NTK rescalings computed in __init__.
    wf = weight_factor / math.sqrt(in_features)
    bf = bias_factor

    # --- Test 1: small module-sized case, f32, prepared-params path ---------
    x = jax.random.normal(kx, (8, in_features), jnp.float32)
    params = prepare_linear_params(weight, bias)
    y = jax.block_until_ready(
        linear_layer_forward_prepared(x, params, weight_factor=wf, bias_factor=bf)
    )
    y_ref = x @ (wf * weight).T + bf * bias
    assert y.shape == (8, out_features)
    assert jnp.allclose(y, y_ref, atol=1e-5, rtol=1e-5), "mismatch vs reference (small)"

    # --- Test 2: larger, non-tile-aligned shapes (exercises padding path) ---
    M2, K2, N2 = 300, 200, 384
    x2 = jax.random.normal(kb, (M2, K2), jnp.float32)
    w2 = jax.random.normal(kw, (N2, K2), jnp.float32)
    b2 = jax.random.normal(kx, (N2,), jnp.float32)
    wf2 = 1.0 / math.sqrt(K2)
    y2 = jax.block_until_ready(
        linear_layer_forward(x2, w2, b2, weight_factor=wf2, bias_factor=bf)
    )
    y2_ref = x2 @ (wf2 * w2).T + bf * b2
    assert jnp.allclose(y2, y2_ref, atol=1e-4, rtol=1e-4), "mismatch (large f32 case)"

    # --- Test 3: bf16 compute path (f32 accumulation), loose/bf16 reference -
    params_bf16 = prepare_linear_params(w2, b2, compute_dtype=jnp.bfloat16)
    y3 = jax.block_until_ready(
        linear_layer_forward_prepared(x2, params_bf16, weight_factor=wf2, bias_factor=bf)
    )
    y3_ref = (
        jnp.dot(
            x2.astype(jnp.bfloat16),
            w2.T.astype(jnp.bfloat16),
            preferred_element_type=jnp.float32,
        )
        * wf2
        + bf * b2
    )
    assert jnp.allclose(y3, y3_ref, atol=2e-3, rtol=2e-3), "mismatch (bf16 case)"

    print("KERNEL_OK")
</pallas_src>

<mosaic_0001>
module attributes {stable_mosaic.version = 11 : i64} {
  func.func @_linear_kernel(%arg0: i32, %arg1: i32, %arg2: i32, %arg3: memref<8x128xf32, #tpu.memory_space<vmem>>, %arg4: memref<128x128xf32, #tpu.memory_space<vmem>>, %arg5: memref<1x128xf32, #tpu.memory_space<vmem>>, %arg6: memref<8x128xf32, #tpu.memory_space<vmem>>, %arg7: memref<8x128xf32, #tpu.memory_space<vmem>>) attributes {dimension_semantics = [#tpu.dimension_semantics<parallel>, #tpu.dimension_semantics<parallel>, #tpu.dimension_semantics<arbitrary>], iteration_bounds = array<i64: 1, 1, 1>, scalar_prefetch = 0 : i64, scratch_operands = 1 : i64, tpu.core_type = #tpu.core_type<tc>, window_params = [{transform_indices = @transform_0, window_bounds = array<i64: 8, 128>}, {transform_indices = @transform_1, window_bounds = array<i64: 128, 128>}, {transform_indices = @transform_2, window_bounds = array<i64: 1, 128>}, {transform_indices = @transform_3, window_bounds = array<i64: 8, 128>}]} {
    %c0_i32 = arith.constant 0 : i32
    %0 = arith.cmpi eq, %arg2, %c0_i32 : i32
    %1 = arith.extui %0 : i1 to i32
    %c0_i32_0 = arith.constant 0 : i32
    %2 = arith.cmpi ne, %1, %c0_i32_0 : i32
    scf.if %2 {
      %cst_10 = arith.constant 0.000000e+00 : f32
      %12 = vector.broadcast %cst_10 : f32 to vector<8x128xf32>
      %c0_11 = arith.constant 0 : index
      %c0_12 = arith.constant 0 : index
      %13 = vector.load %arg7[%c0_11, %c0_12] : memref<8x128xf32, #tpu.memory_space<vmem>>, vector<8x128xf32>
      tpu.vector_store %arg7[%c0_11, %c0_12], %12 {strides = array<i32>} : memref<8x128xf32, #tpu.memory_space<vmem>>, vector<8x128xf32>,
    } else {
    }
    %c0 = arith.constant 0 : index
    %c0_1 = arith.constant 0 : index
    %3 = vector.load %arg7[%c0, %c0_1] : memref<8x128xf32, #tpu.memory_space<vmem>>, vector<8x128xf32>
    %c0_2 = arith.constant 0 : index
    %c0_3 = arith.constant 0 : index
    %4 = vector.load %arg3[%c0_2, %c0_3] : memref<8x128xf32, #tpu.memory_space<vmem>>, vector<8x128xf32>
    %c0_4 = arith.constant 0 : index
    %c0_5 = arith.constant 0 : index
    %5 = vector.load %arg4[%c0_4, %c0_5] : memref<128x128xf32, #tpu.memory_space<vmem>>, vector<128x128xf32>
    %cst = arith.constant dense<0.000000e+00> : vector<8x128xf32>
    %6 = tpu.matmul %4, %5, %cst {dimension_numbers = #tpu.dot_dimension_numbers<[1], [0], [0], [1], [0, 0, 1, 1], [], []>} : vector<8x128xf32>, vector<128x128xf32>, vector<8x128xf32> -> vector<8x128xf32>
    %7 = arith.addf %3, %6 : vector<8x128xf32>
    %c0_6 = arith.constant 0 : index
    %c0_7 = arith.constant 0 : index
    %8 = vector.load %arg7[%c0_6, %c0_7] : memref<8x128xf32, #tpu.memory_space<vmem>>, vector<8x128xf32>
    tpu.vector_store %arg7[%c0_6, %c0_7], %7 {strides = array<i32>} : memref<8x128xf32, #tpu.memory_space<vmem>>, vector<8x128xf32>,
    %c0_i32_8 = arith.constant 0 : i32
    %9 = arith.cmpi eq, %arg2, %c0_i32_8 : i32
    %10 = arith.extui %9 : i1 to i32
    %c0_i32_9 = arith.constant 0 : i32
    %11 = arith.cmpi ne, %10, %c0_i32_9 : i32
    scf.if %11 {
      %c0_10 = arith.constant 0 : index
      %c0_11 = arith.constant 0 : index
      %12 = vector.load %arg7[%c0_10, %c0_11] : memref<8x128xf32, #tpu.memory_space<vmem>>, vector<8x128xf32>
      %cst_12 = arith.constant 0.176776692 : f32
      %13 = vector.broadcast %cst_12 : f32 to vector<8x128xf32>
      %14 = arith.mulf %12, %13 : vector<8x128xf32>
      %c0_13 = arith.constant 0 : index
      %c0_14 = arith.constant 0 : index
      %15 = vector.load %arg5[%c0_13, %c0_14] : memref<1x128xf32, #tpu.memory_space<vmem>>, vector<1x128xf32>
      %cst_15 = arith.constant 1.000000e-01 : f32
      %16 = vector.broadcast %cst_15 : f32 to vector<1x128xf32>
      %17 = arith.mulf %16, %15 : vector<1x128xf32>
      %18 = vector.broadcast %17 : vector<1x128xf32> to vector<8x128xf32>
      %19 = arith.addf %14, %18 : vector<8x128xf32>
      %c0_16 = arith.constant 0 : index
      %c0_17 = arith.constant 0 : index
      %20 = vector.load %arg6[%c0_16, %c0_17] : memref<8x128xf32, #tpu.memory_space<vmem>>, vector<8x128xf32>
      tpu.vector_store %arg6[%c0_16, %c0_17], %19 {strides = array<i32>} : memref<8x128xf32, #tpu.memory_space<vmem>>, vector<8x128xf32>,
    } else {
    }
    return
  }
  func.func @transform_0(%arg0: i32, %arg1: i32, %arg2: i32) -> (i32, i32) {
    %c0_i32 = arith.constant 0 : i32
    return %arg0, %arg2 : i32, i32
  }
  func.func @transform_1(%arg0: i32, %arg1: i32, %arg2: i32) -> (i32, i32) {
    %c0_i32 = arith.constant 0 : i32
    return %arg2, %arg1 : i32, i32
  }
  func.func @transform_2(%arg0: i32, %arg1: i32, %arg2: i32) -> (i32, i32) {
    %c0_i32 = arith.constant 0 : i32
    %c0_i32_0 = arith.constant 0 : i32
    return %c0_i32, %arg1 : i32, i32
  }
  func.func @transform_3(%arg0: i32, %arg1: i32, %arg2: i32) -> (i32, i32) {
    %c0_i32 = arith.constant 0 : i32
    return %arg0, %arg1 : i32, i32
  }
}

</mosaic_0001>

<llo_original>
// kernel: tpu_custom_call.1
$region0: #{tpu_custom_call.1}
  #allocation0 [shape = 'u32[]', space=smem, size = 0x4, offset = 0x4, fixed_abs, tag = 'smem constant byte address 0x4 - core index']
  #allocation1 [shape = 'u32[144,128]{1,0:T(1,128)}', space=vmem, size = 0x12000, scoped, tag = 'internal scratch']
  #allocation2 [shape = 'f32[8,128]{1,0:T(8,128)}', space=vmem, size = 0x1000, scoped, tag = 'scratch operand']
  %s0 = inlined_call_operand.hbm [shape: f32[8,128], index: 0, kind: input, shape index: {}]
  %s1 = inlined_call_operand.hbm [shape: f32[128,128], index: 1, kind: input, shape index: {}]
  %s2 = inlined_call_operand.vmem [shape: f32[1,128], index: 2, kind: input, shape index: {}]
  %s3 = inlined_call_operand.hbm [shape: f32[8,128], index: 3, kind: output, shape index: {}]
  %s4 = sld [smem:[#allocation0]]
  $region38: #{tpu_custom_call.1} parent=0
    _
  %s6 = ssub.s32 1, %s4
  %s7 = scalar_select 0, %s6, %s4
  $region1: #{tpu_custom_call.1} parent=0
    #allocation3 [shape = 'u8[4096]{0}', space=vmem, size = 0x1000, scoped, tag = 'input window, operand 0, single buffered']
    #allocation4 [shape = 's32[1]{0}', space=sflag, size = 0x4, scoped, tag = 'scoped memory for tpu_custom_call.1']
    #allocation5 [shape = 's32[1]{0}', space=sflag, size = 0x4, scoped, tag = 'scoped memory for tpu_custom_call.1']
    #allocation6 [shape = 'u8[65536]{0}', space=vmem, size = 0x10000, scoped, tag = 'input window, operand 1, single buffered']
    #allocation7 [shape = 's32[1]{0}', space=sflag, size = 0x4, scoped, tag = 'scoped memory for tpu_custom_call.1']
    #allocation8 [shape = 'u8[4096]{0}', space=vmem, size = 0x1000, scoped, tag = 'output window, operand 0, single buffered']
    %8 = vsyncpa [#allocation4], 0
    %9 = vsyncpa [#allocation7], 0
    %10 = vsyncpa [#allocation5], 0
    // Predicated region
    $region2: #{tpu_custom_call.1} parent=1 // pred_check
      _
    $region3: #{tpu_custom_call.1} parent=1 // pred_check_branch
      %12 = sbr.rel (0) target = $region5
    $region4: #{tpu_custom_call.1} parent=1 // pred_region
      %s14 = ssub.s32 128, 128
      %15 = vsyncadd [#allocation4], %s14
      %s17 = sshll.u32 [#allocation3], 4
      %s18 = int_to_ptr.vmem [resolvable:$true] %s17
      %20 = dma.hbm_to_vmem [thread:$0]  %s0, 128, %s18, [#allocation4]
    $region5: #{tpu_custom_call.1} parent=1 // pred_fallthru
      _
    // Predicated region
    $region6: #{tpu_custom_call.1} parent=1 // pred_check
      _
    $region7: #{tpu_custom_call.1} parent=1 // pred_check_branch
      %22 = sbr.rel (0) target = $region9
    $region8: #{tpu_custom_call.1} parent=1 // pred_region
      %s24 = ssub.s32 2048, 2048
      %25 = vsyncadd [#allocation7], %s24
      %s26 = sshll.u32 [#allocation6], 4
      %s27 = int_to_ptr.vmem [resolvable:$true] %s26
      %32 = dma.hbm_to_vmem [thread:$0]  %s1, 2048, %s27, [#allocation7], 128, 128, 8
    $region9: #{tpu_custom_call.1} parent=1 // pred_fallthru
      _
    // Predicated region
    $region10: #{tpu_custom_call.1} parent=1 // pred_check
      _
    $region11: #{tpu_custom_call.1} parent=1 // pred_check_branch
      %34 = sbr.rel (0) target = $region13
    $region12: #{tpu_custom_call.1} parent=1 // pred_region
      _
    $region13: #{tpu_custom_call.1} parent=1 // pred_fallthru
      _
    // Predicated region
    $region14: #{tpu_custom_call.1} parent=1 // pred_check
      _
    $region15: #{tpu_custom_call.1} parent=1 // pred_check_branch
      %36 = sbr.rel (0) target = $region17
    $region16: #{tpu_custom_call.1} parent=1 // pred_region
      %37 = dma.done [#allocation4], 128
    $region17: #{tpu_custom_call.1} parent=1 // pred_fallthru
      _
    // Predicated region
    $region18: #{tpu_custom_call.1} parent=1 // pred_check
      _
    $region19: #{tpu_custom_call.1} parent=1 // pred_check_branch
      %39 = sbr.rel (0) target = $region21
    $region20: #{tpu_custom_call.1} parent=1 // pred_region
      %40 = dma.done [#allocation7], 2048
    $region21: #{tpu_custom_call.1} parent=1 // pred_fallthru
      _
    %p41 = scmp.eq.s32.totalorder 0, 0
    // Predicated region
    $region22: #{tpu_custom_call.1} parent=1 // pred_check
      %p42 = pneg %p41
    $region23: #{tpu_custom_call.1} parent=1 // pred_check_branch
      %44 = sbr.rel (%p42) target = $region25
    $region24: #{tpu_custom_call.1} parent=1 // pred_region
      %45 = vst [vmem:[#allocation2] sm:$0xff] 0.0
    $region25: #{tpu_custom_call.1} parent=1 // pred_fallthru
      _
    %v46 = vld [vmem:[#allocation2] sm:$0xff]
    %v47 = vld [vmem:[#allocation3] sm:$0xff]
    %v48 = vld [vmem:[#allocation6] sm:$0xff]
    %v49 = vld [vmem:[#allocation6 + $0x8] sm:$0xff]
    %v50 = vld [vmem:[#allocation6 + $0x10] sm:$0xff]
    %v51 = vld [vmem:[#allocation6 + $0x18] sm:$0xff]
    %v52 = vld [vmem:[#allocation6 + $0x20] sm:$0xff]
    %v53 = vld [vmem:[#allocation6 + $0x28] sm:$0xff]
    %v54 = vld [vmem:[#allocation6 + $0x30] sm:$0xff]
    %v55 = vld [vmem:[#allocation6 + $0x38] sm:$0xff]
    %v56 = vld [vmem:[#allocation6 + $0x40] sm:$0xff]
    %v57 = vld [vmem:[#allocation6 + $0x48] sm:$0xff]
    %v58 = vld [vmem:[#allocation6 + $0x50] sm:$0xff]
    %v59 = vld [vmem:[#allocation6 + $0x58] sm:$0xff]
    %v60 = vld [vmem:[#allocation6 + $0x60] sm:$0xff]
    %v61 = vld [vmem:[#allocation6 + $0x68] sm:$0xff]
    %v62 = vld [vmem:[#allocation6 + $0x70] sm:$0xff]
    %v63 = vld [vmem:[#allocation6 + $0x78] sm:$0xff]
    %64 = vmatprep.subr.mxu0 0.0
    %65 = vmatpush1.msra.mxu0 %v63
    %66 = vmatprep.subr.mxu0 0.0
    %67 = vmatpush1.msra.mxu0 %v62
    %68 = vmatprep.subr.mxu0 0.0
    %69 = vmatpush1.msra.mxu0 %v61
    %70 = vmatprep.subr.mxu0 0.0
    %71 = vmatpush1.msra.mxu0 %v60
    %72 = vmatprep.subr.mxu0 0.0
    %73 = vmatpush1.msra.mxu0 %v59
    %74 = vmatprep.subr.mxu0 0.0
    %75 = vmatpush1.msra.mxu0 %v58
    %76 = vmatprep.subr.mxu0 0.0
    %77 = vmatpush1.msra.mxu0 %v57
    %78 = vmatprep.subr.mxu0 0.0
    %79 = vmatpush1.msra.mxu0 %v56
    %80 = vmatprep.subr.mxu0 0.0
    %81 = vmatpush1.msra.mxu0 %v55
    %82 = vmatprep.subr.mxu0 0.0
    %83 = vmatpush1.msra.mxu0 %v54
    %84 = vmatprep.subr.mxu0 0.0
    %85 = vmatpush1.msra.mxu0 %v53
    %86 = vmatprep.subr.mxu0 0.0
    %87 = vmatpush1.msra.mxu0 %v52
    %88 = vmatprep.subr.mxu0 0.0
    %89 = vmatpush1.msra.mxu0 %v51
    %90 = vmatprep.subr.mxu0 0.0
    %91 = vmatpush1.msra.mxu0 %v50
    %92 = vmatprep.subr.mxu0 0.0
    %93 = vmatpush1.msra.mxu0 %v49
    %94 = vmatprep.subr.mxu0 0.0
    %95 = vmatpush1.msra.mxu0 %v48
    %96 = vmatprep.subr.mxu0 0.0
    %97 = vmatpush2.msra.mxu0 0.0
    %98 = vmatprep.subr.mxu0 0.0
    %99 = vmatpush2.msra.mxu0 0.0
    %100 = vmatprep.subr.mxu0 0.0
    %101 = vmatpush2.msra.mxu0 0.0
    %102 = vmatprep.subr.mxu0 0.0
    %103 = vmatpush2.msra.mxu0 0.0
    %104 = vmatprep.subr.mxu0 0.0
    %105 = vmatpush2.msra.mxu0 0.0
    %106 = vmatprep.subr.mxu0 0.0
    %107 = vmatpush2.msra.mxu0 0.0
    %108 = vmatprep.subr.mxu0 0.0
    %109 = vmatpush2.msra.mxu0 0.0
    %110 = vmatprep.subr.mxu0 0.0
    %111 = vmatpush2.msra.mxu0 0.0
    %112 = vmatprep.subr.mxu0 0.0
    %113 = vmatpush2.msra.mxu0 0.0
    %114 = vmatprep.subr.mxu0 0.0
    %115 = vmatpush2.msra.mxu0 0.0
    %116 = vmatprep.subr.mxu0 0.0
    %117 = vmatpush2.msra.mxu0 0.0
    %118 = vmatprep.subr.mxu0 0.0
    %119 = vmatpush2.msra.mxu0 0.0
    %120 = vmatprep.subr.mxu0 0.0
    %121 = vmatpush2.msra.mxu0 0.0
    %122 = vmatprep.subr.mxu0 0.0
    %123 = vmatpush2.msra.mxu0 0.0
    %124 = vmatprep.subr.mxu0 0.0
    %125 = vmatpush2.msra.mxu0 0.0
    %126 = vmatprep.subr.mxu0 0.0
    %127 = vmatpush2.msra.mxu0 0.0
    %128 = vmatprep.mubr.f32.mxu0 0.0
    %129 = vmatmul.mubr.f32.gmra.mxu0 %v47
    %v130 = vpop.f32.mrf.mxu0
    %v131 = vadd.f32 0.0, %v130
    %v132 = vpop.f32.mrf.mxu0
    %133 = vdwg.mxu0
    %v134 = vadd.f32 %v46, %v131
    %135 = vst [vmem:[#allocation2] sm:$0xff] %v134
    // Predicated region
    $region26: #{tpu_custom_call.1} parent=1 // pred_check
      %p136 = pneg %p41
    $region27: #{tpu_custom_call.1} parent=1 // pred_check_branch
      %138 = sbr.rel (%p136) target = $region29
    $region28: #{tpu_custom_call.1} parent=1 // pred_region
      %v139 = vld [vmem:[#allocation2] sm:$0xff]
      %v140 = vmul.f32 %v139, 0.17677669
      %v141 = vld [vmem:[%s2] sm:$0x1]
      %v142 = vmul.f32 %v141, 0.1
      %v144 = vlaneseq
      %v145 = vshrl.u32 %v144, 7
      %v146 = vsub.s32 0, %v145
      %v147 = vrot.slane %v142, %v146
      %v149 = vadd.f32 %v140, %v147
      %150 = vst [vmem:[#allocation8] sm:$0xff] %v149
    $region29: #{tpu_custom_call.1} parent=1 // pred_fallthru
      _
    // Predicated region
    $region30: #{tpu_custom_call.1} parent=1 // pred_check
      _
    $region31: #{tpu_custom_call.1} parent=1 // pred_check_branch
      %152 = sbr.rel (0) target = $region33
    $region32: #{tpu_custom_call.1} parent=1 // pred_region
      %s154 = ssub.s32 128, 128
      %155 = vsyncadd [#allocation5], %s154
      %s157 = sshll.u32 [#allocation8], 4
      %s158 = int_to_ptr.vmem [resolvable:$true] %s157
      %160 = dma.vmem_to_hbm [thread:$0]  %s158, 128, %s3, [#allocation5]
    $region33: #{tpu_custom_call.1} parent=1 // pred_fallthru
      _
    // Predicated region
    $region34: #{tpu_custom_call.1} parent=1 // pred_check
      _
    $region35: #{tpu_custom_call.1} parent=1 // pred_check_branch
      %162 = sbr.rel (0) target = $region37
    $region36: #{tpu_custom_call.1} parent=1 // pred_region
      %163 = dma.done [#allocation5], 128
    $region37: #{tpu_custom_call.1} parent=1 // pred_fallthru
      _
    %164 = vsyncpa [#allocation4], 1
    %165 = vsyncpa [#allocation7], 1
    %166 = vsyncpa [#allocation5], 1

</llo_original>
